<compile_context>
chip_gen: v5e
topology: v5e:2x2
jax: 0.10.0
libtpu: 0.0.40
codegen_flags: <defaults>
</compile_context>

<pallas_src>
import jax
import jax.numpy as jnp
from jax.experimental import pallas as pl
from jax.experimental.pallas import tpu as pltpu


def _round_up(x, m):
    return (x + m - 1) // m * m


def base_model_kernel(x_ref, blk_ref, w_enc_ref, w_dec_ref, b_dec_ref, out_ref):
    # Encoder: h = tanh(x @ W_enc + (block_inputs + b_enc))  [b_enc pre-folded]
    # bf16 MXU inputs, f32 accumulate; elementwise in f32.
    h = jnp.tanh(
        jnp.dot(x_ref[...], w_enc_ref[...], preferred_element_type=jnp.float32)
        + blk_ref[...]
    )
    # Decoder: logits = h @ W_dec + b_dec
    logits = (
        jnp.dot(h.astype(jnp.bfloat16), w_dec_ref[...],
                preferred_element_type=jnp.float32)
        + b_dec_ref[...]
    )
    # decode_function = log_softmax over the last (vocab) axis.
    m = jnp.max(logits, axis=-1, keepdims=True)          # XLU
    shifted = logits - m
    denom = jnp.sum(jnp.exp(shifted), axis=-1, keepdims=True)   # EUP + XLU
    out_ref[...] = (shifted - jnp.log(denom)).astype(out_ref.dtype)


def base_model_forward(inputs, block_inputs, params, input_lengths=None,
                       out_dtype=jnp.float32):
    """inputs: [B, S, D_in] f32, block_inputs: [B, S, H] f32 -> [B, S, V]."""
    # TODO(synk): input_lengths is accepted and ignored (no defined semantics).
    B, S, Din = inputs.shape
    H = params["w_enc"].shape[1]
    V = params["w_dec"].shape[1]
    N = B * S

    LANE = 128
    Din_p = _round_up(Din, LANE)
    H_p = _round_up(H, LANE)
    V_p = _round_up(V, LANE)

    # Row tile: large (256) for MXU / pipeline efficiency; shrink for tiny N.
    tm = min(256, _round_up(N, 8))
    N_p = _round_up(N, tm)

    # ---- wrapper-side layout / dtype preparation --------------------------
    # x: zero-pad rows + feature dim, cast to bf16 for the MXU.
    x = jnp.zeros((N_p, Din_p), jnp.bfloat16)
    x = x.at[:N, :Din].set(inputs.reshape(N, Din).astype(jnp.bfloat16))

    # block_inputs with b_enc folded in; stays f32 for elementwise precision.
    blk = jnp.zeros((N_p, H_p), jnp.float32)
    blk = blk.at[:N, :H].set(
        block_inputs.reshape(N, H) + params["b_enc"].reshape(1, H))

    # Weights in bf16; zero padding keeps padded lanes mathematically inert.
    w_enc = jnp.zeros((Din_p, H_p), jnp.bfloat16)
    w_enc = w_enc.at[:Din, :H].set(params["w_enc"].astype(jnp.bfloat16))
    w_dec = jnp.zeros((H_p, V_p), jnp.bfloat16)
    w_dec = w_dec.at[:H, :V].set(params["w_dec"].astype(jnp.bfloat16))

    # Decoder bias: padded vocab lanes get -1e30 so exp() underflows to 0 and
    # they do not perturb the log-softmax over the real V columns.
    b_dec = jnp.full((1, V_p), -1e30, jnp.float32)
    b_dec = b_dec.at[:, :V].set(params["b_dec"].reshape(1, V))

    grid = (N_p // tm,)

    # ---- explicit VMEM budget (double-buffered tiles + resident weights) ---
    out_bytes = jnp.dtype(out_dtype).itemsize
    bytes_resident = w_enc.size * 2 + w_dec.size * 2 + b_dec.size * 4
    bytes_tiles = 2 * (tm * Din_p * 2 + tm * H_p * 4 + tm * V_p * out_bytes)
    vmem_limit = int(min(max(int(1.5 * (bytes_resident + bytes_tiles)),
                             32 * 1024 * 1024),
                         64 * 1024 * 1024))

    cost = pl.CostEstimate(
        flops=2 * N_p * (Din_p * H_p + H_p * V_p),
        transcendentals=N_p * (H_p + V_p),          # tanh + exp
        bytes_accessed=(x.size * 2 + blk.size * 4 + w_enc.size * 2
                        + w_dec.size * 2 + b_dec.size * 4
                        + N_p * V_p * out_bytes),
    )

    out = pl.pallas_call(
        base_model_kernel,
        out_shape=jax.ShapeDtypeStruct((N_p, V_p), out_dtype),
        grid_spec=pltpu.PrefetchScalarGridSpec(
            num_scalar_prefetch=0,
            grid=grid,
            in_specs=[
                pl.BlockSpec((tm, Din_p), lambda i: (i, 0)),   # x rows (bf16)
                pl.BlockSpec((tm, H_p), lambda i: (i, 0)),     # blk (+b_enc)
                pl.BlockSpec((Din_p, H_p), lambda i: (0, 0)),  # W_enc resident
                pl.BlockSpec((H_p, V_p), lambda i: (0, 0)),    # W_dec resident
                pl.BlockSpec((1, V_p), lambda i: (0, 0)),      # b_dec
            ],
            out_specs=pl.BlockSpec((tm, V_p), lambda i: (i, 0)),
        ),
        compiler_params=pltpu.CompilerParams(
            dimension_semantics=("parallel",),
            vmem_limit_bytes=vmem_limit,
        ),
        cost_estimate=cost,
    )(x, blk, w_enc, w_dec, b_dec)

    return out[:N, :V].reshape(B, S, V)


def init_params(key, d_in, hidden, vocab):
    k1, k2 = jax.random.split(key)
    scale_e = 1.0 / jnp.sqrt(d_in)
    scale_d = 1.0 / jnp.sqrt(hidden)
    return {
        "w_enc": jax.random.normal(k1, (d_in, hidden), jnp.float32) * scale_e,
        "b_enc": jnp.zeros((1, hidden), jnp.float32),
        "w_dec": jax.random.normal(k2, (hidden, vocab), jnp.float32) * scale_d,
        "b_dec": jnp.zeros((1, vocab), jnp.float32),
    }


if __name__ == "__main__":
    B, S, D_IN, HIDDEN, VOCAB = 2, 8, 32, 32, 128

    key = jax.random.PRNGKey(0)
    k_x, k_blk, k_p = jax.random.split(key, 3)

    inputs = jax.random.normal(k_x, (B, S, D_IN), jnp.float32)
    block_inputs = jax.random.normal(k_blk, (B, S, HIDDEN), jnp.float32)
    params = init_params(k_p, D_IN, HIDDEN, VOCAB)

    out = base_model_forward(inputs, block_inputs, params)
    jax.block_until_ready(out)

    # Reference with identical bf16 MXU casts / f32 accumulation.
    xb = inputs.reshape(-1, D_IN).astype(jnp.bfloat16)
    wE = params["w_enc"].astype(jnp.bfloat16)
    wD = params["w_dec"].astype(jnp.bfloat16)
    h_ref = jnp.tanh(
        jnp.dot(xb, wE, preferred_element_type=jnp.float32)
        + block_inputs.reshape(-1, HIDDEN) + params["b_enc"])
    logits_ref = (jnp.dot(h_ref.astype(jnp.bfloat16), wD,
                          preferred_element_type=jnp.float32)
                  + params["b_dec"])
    ref = jax.nn.log_softmax(logits_ref, axis=-1).reshape(B, S, VOCAB)

    assert out.shape == (B, S, VOCAB)
    err = float(jnp.max(jnp.abs(out - ref)))
    assert err < 5e-3, f"max abs err {err}"
    print("KERNEL_OK")
</pallas_src>

<mosaic_0001>
module attributes {stable_mosaic.version = 11 : i64} {
  func.func @base_model_kernel(%arg0: i32, %arg1: memref<16x128xbf16, #tpu.memory_space<vmem>>, %arg2: memref<16x128xf32, #tpu.memory_space<vmem>>, %arg3: memref<128x128xbf16, #tpu.memory_space<vmem>>, %arg4: memref<128x128xbf16, #tpu.memory_space<vmem>>, %arg5: memref<1x128xf32, #tpu.memory_space<vmem>>, %arg6: memref<16x128xf32, #tpu.memory_space<vmem>>) attributes {dimension_semantics = [#tpu.dimension_semantics<parallel>], iteration_bounds = array<i64: 1>, scalar_prefetch = 0 : i64, scratch_operands = 0 : i64, tpu.core_type = #tpu.core_type<tc>, window_params = [{transform_indices = @transform_0, window_bounds = array<i64: 16, 128>}, {transform_indices = @transform_1, window_bounds = array<i64: 16, 128>}, {pipeline_mode = #tpu.pipeline_mode<synchronous>, transform_indices = @transform_2, window_bounds = array<i64: 128, 128>}, {pipeline_mode = #tpu.pipeline_mode<synchronous>, transform_indices = @transform_3, window_bounds = array<i64: 128, 128>}, {pipeline_mode = #tpu.pipeline_mode<synchronous>, transform_indices = @transform_4, window_bounds = array<i64: 1, 128>}, {transform_indices = @transform_5, window_bounds = array<i64: 16, 128>}]} {
    %c0 = arith.constant 0 : index
    %c0_0 = arith.constant 0 : index
    %0 = vector.load %arg1[%c0, %c0_0] : memref<16x128xbf16, #tpu.memory_space<vmem>>, vector<16x128xbf16>
    %c0_1 = arith.constant 0 : index
    %c0_2 = arith.constant 0 : index
    %1 = vector.load %arg3[%c0_1, %c0_2] : memref<128x128xbf16, #tpu.memory_space<vmem>>, vector<128x128xbf16>
    %cst = arith.constant dense<0.000000e+00> : vector<16x128xf32>
    %2 = tpu.matmul %0, %1, %cst {dimension_numbers = #tpu.dot_dimension_numbers<[1], [0], [0], [1], [0, 0, 1, 1], [], []>} : vector<16x128xbf16>, vector<128x128xbf16>, vector<16x128xf32> -> vector<16x128xf32>
    %c0_3 = arith.constant 0 : index
    %c0_4 = arith.constant 0 : index
    %3 = vector.load %arg2[%c0_3, %c0_4] : memref<16x128xf32, #tpu.memory_space<vmem>>, vector<16x128xf32>
    %4 = arith.addf %2, %3 : vector<16x128xf32>
    %5 = math.tanh %4 : vector<16x128xf32>
    %6 = arith.truncf %5 : vector<16x128xf32> to vector<16x128xbf16>
    %c0_5 = arith.constant 0 : index
    %c0_6 = arith.constant 0 : index
    %7 = vector.load %arg4[%c0_5, %c0_6] : memref<128x128xbf16, #tpu.memory_space<vmem>>, vector<128x128xbf16>
    %cst_7 = arith.constant dense<0.000000e+00> : vector<16x128xf32>
    %8 = tpu.matmul %6, %7, %cst_7 {dimension_numbers = #tpu.dot_dimension_numbers<[1], [0], [0], [1], [0, 0, 1, 1], [], []>} : vector<16x128xbf16>, vector<128x128xbf16>, vector<16x128xf32> -> vector<16x128xf32>
    %c0_8 = arith.constant 0 : index
    %c0_9 = arith.constant 0 : index
    %9 = vector.load %arg5[%c0_8, %c0_9] : memref<1x128xf32, #tpu.memory_space<vmem>>, vector<1x128xf32>
    %10 = vector.broadcast %9 : vector<1x128xf32> to vector<16x128xf32>
    %11 = arith.addf %8, %10 : vector<16x128xf32>
    %cst_10 = arith.constant dense<0xFF800000> : vector<16xf32>
    %12 = vector.multi_reduction <maximumf>, %11, %cst_10 [1] : vector<16x128xf32> to vector<16xf32>
    %13 = vector.shape_cast %12 : vector<16xf32> to vector<16x1xf32>
    %14 = vector.broadcast %13 : vector<16x1xf32> to vector<16x128xf32>
    %15 = arith.subf %11, %14 : vector<16x128xf32>
    %16 = math.exp %15 : vector<16x128xf32>
    %cst_11 = arith.constant dense<0.000000e+00> : vector<16xf32>
    %17 = vector.multi_reduction <add>, %16, %cst_11 [1] : vector<16x128xf32> to vector<16xf32>
    %18 = vector.shape_cast %17 : vector<16xf32> to vector<16x1xf32>
    %19 = math.log %18 : vector<16x1xf32>
    %20 = vector.broadcast %19 : vector<16x1xf32> to vector<16x128xf32>
    %21 = arith.subf %15, %20 : vector<16x128xf32>
    %c0_12 = arith.constant 0 : index
    %c0_13 = arith.constant 0 : index
    %22 = vector.load %arg6[%c0_12, %c0_13] : memref<16x128xf32, #tpu.memory_space<vmem>>, vector<16x128xf32>
    tpu.vector_store %arg6[%c0_12, %c0_13], %21 {strides = array<i32>} : memref<16x128xf32, #tpu.memory_space<vmem>>, vector<16x128xf32>,
    return
  }
  func.func @transform_0(%arg0: i32) -> (i32, i32) {
    %c0_i32 = arith.constant 0 : i32
    %c0_i32_0 = arith.constant 0 : i32
    return %arg0, %c0_i32 : i32, i32
  }
  func.func @transform_1(%arg0: i32) -> (i32, i32) {
    %c0_i32 = arith.constant 0 : i32
    %c0_i32_0 = arith.constant 0 : i32
    return %arg0, %c0_i32 : i32, i32
  }
  func.func @transform_2(%arg0: i32) -> (i32, i32) {
    %c0_i32 = arith.constant 0 : i32
    %c0_i32_0 = arith.constant 0 : i32
    %c0_i32_1 = arith.constant 0 : i32
    return %c0_i32, %c0_i32_0 : i32, i32
  }
  func.func @transform_3(%arg0: i32) -> (i32, i32) {
    %c0_i32 = arith.constant 0 : i32
    %c0_i32_0 = arith.constant 0 : i32
    %c0_i32_1 = arith.constant 0 : i32
    return %c0_i32, %c0_i32_0 : i32, i32
  }
  func.func @transform_4(%arg0: i32) -> (i32, i32) {
    %c0_i32 = arith.constant 0 : i32
    %c0_i32_0 = arith.constant 0 : i32
    %c0_i32_1 = arith.constant 0 : i32
    return %c0_i32, %c0_i32_0 : i32, i32
  }
  func.func @transform_5(%arg0: i32) -> (i32, i32) {
    %c0_i32 = arith.constant 0 : i32
    %c0_i32_0 = arith.constant 0 : i32
    return %arg0, %c0_i32 : i32, i32
  }
}

</mosaic_0001>

<llo_original>
// kernel: tpu_custom_call.1
$region0: #{tpu_custom_call.1}
  #allocation0 [shape = 'u32[]', space=smem, size = 0x4, offset = 0x4, fixed_abs, tag = 'smem constant byte address 0x4 - core index']
  #allocation1 [shape = 'u32[72,128]{1,0:T(1,128)}', space=vmem, size = 0x9000, scoped, tag = 'internal scratch']
  %s0 = inlined_call_operand.hbm [shape: bf16[16,128], index: 0, kind: input, shape index: {}]
  %s1 = inlined_call_operand.hbm [shape: f32[16,128], index: 1, kind: input, shape index: {}]
  %s2 = inlined_call_operand.hbm [shape: bf16[128,128], index: 2, kind: input, shape index: {}]
  %s3 = inlined_call_operand.hbm [shape: bf16[128,128], index: 3, kind: input, shape index: {}]
  %s4 = inlined_call_operand.vmem [shape: f32[1,128], index: 4, kind: input, shape index: {}]
  %s5 = inlined_call_operand.hbm [shape: f32[16,128], index: 5, kind: output, shape index: {}]
  %s6 = sld [smem:[#allocation0]]
  $region46: #{tpu_custom_call.1} parent=0
    _
  %s8 = ssub.s32 1, %s6
  %s9 = scalar_select 0, %s8, %s6
  $region1: #{tpu_custom_call.1} parent=0
    #allocation2 [shape = 'u8[4096]{0}', space=vmem, size = 0x1000, scoped, tag = 'input window, operand 0, single buffered']
    #allocation3 [shape = 's32[1]{0}', space=sflag, size = 0x4, scoped, tag = 'scoped memory for tpu_custom_call.1']
    #allocation4 [shape = 's32[1]{0}', space=sflag, size = 0x4, scoped, tag = 'scoped memory for tpu_custom_call.1']
    #allocation5 [shape = 'u8[8192]{0}', space=vmem, size = 0x2000, scoped, tag = 'input window, operand 1, single buffered']
    #allocation6 [shape = 's32[1]{0}', space=sflag, size = 0x4, scoped, tag = 'scoped memory for tpu_custom_call.1']
    #allocation7 [shape = 'u8[32768]{0}', space=vmem, size = 0x8000, scoped, tag = 'input window, operand 2, single buffered']
    #allocation8 [shape = 'u8[32768]{0}', space=vmem, size = 0x8000, scoped, tag = 'input window, operand 3, single buffered']
    #allocation9 [shape = 's32[1]{0}', space=sflag, size = 0x4, scoped, tag = 'scoped memory for tpu_custom_call.1']
    #allocation10 [shape = 'u8[8192]{0}', space=vmem, size = 0x2000, scoped, tag = 'output window, operand 0, single buffered']
    %10 = vsyncpa [#allocation3], 0
    %11 = vsyncpa [#allocation6], 0
    %12 = vsyncpa [#allocation9], 0
    %13 = vsyncpa [#allocation4], 0
    // Predicated region
    $region2: #{tpu_custom_call.1} parent=1 // pred_check
      _
    $region3: #{tpu_custom_call.1} parent=1 // pred_check_branch
      %15 = sbr.rel (0) target = $region5
    $region4: #{tpu_custom_call.1} parent=1 // pred_region
      %17 = vsyncadd [#allocation3], 0
      %s18 = sshll.u32 %s0, 4
      %s19 = int_to_ptr.hbm [resolvable:$true] %s18
      %s20 = sshll.u32 [#allocation2], 4
      %s21 = int_to_ptr.vmem [resolvable:$true] %s20
      %26 = dma.hbm_to_vmem [thread:$0]  %s19, 128, %s21, [#allocation3], 64, 64, 4
    $region5: #{tpu_custom_call.1} parent=1 // pred_fallthru
      _
    // Predicated region
    $region6: #{tpu_custom_call.1} parent=1 // pred_check
      _
    $region7: #{tpu_custom_call.1} parent=1 // pred_check_branch
      %28 = sbr.rel (0) target = $region9
    $region8: #{tpu_custom_call.1} parent=1 // pred_region
      %30 = vsyncadd [#allocation6], 0
      %s31 = sshll.u32 %s1, 4
      %s32 = int_to_ptr.hbm [resolvable:$true] %s31
      %s33 = sshll.u32 [#allocation5], 4
      %s34 = int_to_ptr.vmem [resolvable:$true] %s33
      %39 = dma.hbm_to_vmem [thread:$0]  %s32, 256, %s34, [#allocation6], 128, 128, 8
    $region9: #{tpu_custom_call.1} parent=1 // pred_fallthru
      _
    // Predicated region
    $region10: #{tpu_custom_call.1} parent=1 // pred_check
      _
    $region11: #{tpu_custom_call.1} parent=1 // pred_check_branch
      %41 = sbr.rel (0) target = $region13
    $region12: #{tpu_custom_call.1} parent=1 // pred_region
      %43 = vsyncadd [#allocation6], 0
      %s44 = sshll.u32 %s2, 4
      %s45 = int_to_ptr.hbm [resolvable:$true] %s44
      %s46 = sshll.u32 [#allocation7], 4
      %s47 = int_to_ptr.vmem [resolvable:$true] %s46
      %52 = dma.hbm_to_vmem [thread:$0]  %s45, 1024, %s47, [#allocation6], 64, 64, 4
    $region13: #{tpu_custom_call.1} parent=1 // pred_fallthru
      _
    // Predicated region
    $region14: #{tpu_custom_call.1} parent=1 // pred_check
      _
    $region15: #{tpu_custom_call.1} parent=1 // pred_check_branch
      %54 = sbr.rel (0) target = $region17
    $region16: #{tpu_custom_call.1} parent=1 // pred_region
      %56 = vsyncadd [#allocation9], 0
      %s57 = sshll.u32 %s3, 4
      %s58 = int_to_ptr.hbm [resolvable:$true] %s57
      %s59 = sshll.u32 [#allocation8], 4
      %s60 = int_to_ptr.vmem [resolvable:$true] %s59
      %65 = dma.hbm_to_vmem [thread:$0]  %s58, 1024, %s60, [#allocation9], 64, 64, 4
    $region17: #{tpu_custom_call.1} parent=1 // pred_fallthru
      _
    // Predicated region
    $region18: #{tpu_custom_call.1} parent=1 // pred_check
      _
    $region19: #{tpu_custom_call.1} parent=1 // pred_check_branch
      %67 = sbr.rel (0) target = $region21
    $region20: #{tpu_custom_call.1} parent=1 // pred_region
      _
    $region21: #{tpu_custom_call.1} parent=1 // pred_fallthru
      _
    // Predicated region
    $region22: #{tpu_custom_call.1} parent=1 // pred_check
      _
    $region23: #{tpu_custom_call.1} parent=1 // pred_check_branch
      %69 = sbr.rel (0) target = $region25
    $region24: #{tpu_custom_call.1} parent=1 // pred_region
      %71 = dma.done [#allocation3], 128
    $region25: #{tpu_custom_call.1} parent=1 // pred_fallthru
      _
    // Predicated region
    $region26: #{tpu_custom_call.1} parent=1 // pred_check
      _
    $region27: #{tpu_custom_call.1} parent=1 // pred_check_branch
      %73 = sbr.rel (0) target = $region29
    $region28: #{tpu_custom_call.1} parent=1 // pred_region
      %75 = dma.done [#allocation6], 256
    $region29: #{tpu_custom_call.1} parent=1 // pred_fallthru
      _
    // Predicated region
    $region30: #{tpu_custom_call.1} parent=1 // pred_check
      _
    $region31: #{tpu_custom_call.1} parent=1 // pred_check_branch
      %77 = sbr.rel (0) target = $region33
    $region32: #{tpu_custom_call.1} parent=1 // pred_region
      %79 = dma.done [#allocation6], 1024
    $region33: #{tpu_custom_call.1} parent=1 // pred_fallthru
      _
    // Predicated region
    $region34: #{tpu_custom_call.1} parent=1 // pred_check
      _
    $region35: #{tpu_custom_call.1} parent=1 // pred_check_branch
      %81 = sbr.rel (0) target = $region37
    $region36: #{tpu_custom_call.1} parent=1 // pred_region
      %83 = dma.done [#allocation9], 1024
    $region37: #{tpu_custom_call.1} parent=1 // pred_fallthru
      _
    %v84 = vld [vmem:[#allocation2] sm:$0xf]
    %v85 = vld [vmem:[#allocation2 + $0x4] sm:$0xf]
    %v86 = vld [vmem:[#allocation7] sm:$0xf]
    %v87 = vld [vmem:[#allocation7 + $0x4] sm:$0xf]
    %v88 = vld [vmem:[#allocation7 + $0x8] sm:$0xf]
    %v89 = vld [vmem:[#allocation7 + $0xc] sm:$0xf]
    %v90 = vld [vmem:[#allocation7 + $0x10] sm:$0xf]
    %v91 = vld [vmem:[#allocation7 + $0x14] sm:$0xf]
    %v92 = vld [vmem:[#allocation7 + $0x18] sm:$0xf]
    %v93 = vld [vmem:[#allocation7 + $0x1c] sm:$0xf]
    %v94 = vld [vmem:[#allocation7 + $0x20] sm:$0xf]
    %v95 = vld [vmem:[#allocation7 + $0x24] sm:$0xf]
    %v96 = vld [vmem:[#allocation7 + $0x28] sm:$0xf]
    %v97 = vld [vmem:[#allocation7 + $0x2c] sm:$0xf]
    %v98 = vld [vmem:[#allocation7 + $0x30] sm:$0xf]
    %v99 = vld [vmem:[#allocation7 + $0x34] sm:$0xf]
    %v100 = vld [vmem:[#allocation7 + $0x38] sm:$0xf]
    %v101 = vld [vmem:[#allocation7 + $0x3c] sm:$0xf]
    %v102 = vld [vmem:[#allocation5] sm:$0xff]
    %v103 = vld [vmem:[#allocation5 + $0x8] sm:$0xff]
    %v106 = vunpack.c.l.b16 %v84
    %v107 = vunpack.c.l.b16 %v85
    %v108 = vpack.c.b16 %v107, %v106
    %v126 = vunpack.c.l.b16 %v86
    %v127 = vunpack.c.l.b16 %v87
    %v128 = vunpack.c.l.b16 %v88
    %v129 = vunpack.c.l.b16 %v89
    %v130 = vunpack.c.l.b16 %v90
    %v131 = vunpack.c.l.b16 %v91
    %v132 = vunpack.c.l.b16 %v92
    %v133 = vunpack.c.l.b16 %v93
    %v134 = vunpack.c.l.b16 %v94
    %v135 = vunpack.c.l.b16 %v95
    %v136 = vunpack.c.l.b16 %v96
    %v137 = vunpack.c.l.b16 %v97
    %v138 = vunpack.c.l.b16 %v98
    %v139 = vunpack.c.l.b16 %v99
    %v140 = vunpack.c.l.b16 %v100
    %v141 = vunpack.c.l.b16 %v101
    %v142 = vpack.c.b16 %v127, %v126
    %v143 = vpack.c.b16 %v129, %v128
    %v144 = vpack.c.b16 %v131, %v130
    %v145 = vpack.c.b16 %v133, %v132
    %v146 = vpack.c.b16 %v135, %v134
    %v147 = vpack.c.b16 %v137, %v136
    %v148 = vpack.c.b16 %v139, %v138
    %v149 = vpack.c.b16 %v141, %v140
    %158 = vmatpush.bf16.msra.mxu0 %v149
    %159 = vmatpush.bf16.msra.mxu0 %v148
    %160 = vmatpush.bf16.msra.mxu0 %v147
    %161 = vmatpush.bf16.msra.mxu0 %v146
    %162 = vmatpush.bf16.msra.mxu0 %v145
    %163 = vmatpush.bf16.msra.mxu0 %v144
    %164 = vmatpush.bf16.msra.mxu0 %v143
    %165 = vmatpush.bf16.msra.mxu0 %v142
    %166 = vmatmul.bf16.gmra.mxu0 %v108
    %v167 = vpop.f32.mrf.mxu0
    %v168 = vadd.f32 %v102, %v167
    %v169 = vpop.f32.mrf.mxu0
    %v170 = vadd.f32 %v103, %v169
    %171 = vdwg.mxu0
    %v172 = vtanh.pop %v168
    %v173 = vtanh.pop %v170
    %v174 = vpack.c.bf16 %v173, %v172
    %v175 = vld [vmem:[#allocation8] sm:$0xf]
    %v176 = vld [vmem:[#allocation8 + $0x4] sm:$0xf]
    %v177 = vld [vmem:[#allocation8 + $0x8] sm:$0xf]
    %v178 = vld [vmem:[#allocation8 + $0xc] sm:$0xf]
    %v179 = vld [vmem:[#allocation8 + $0x10] sm:$0xf]
    %v180 = vld [vmem:[#allocation8 + $0x14] sm:$0xf]
    %v181 = vld [vmem:[#allocation8 + $0x18] sm:$0xf]
    %v182 = vld [vmem:[#allocation8 + $0x1c] sm:$0xf]
    %v183 = vld [vmem:[#allocation8 + $0x20] sm:$0xf]
    %v184 = vld [vmem:[#allocation8 + $0x24] sm:$0xf]
    %v185 = vld [vmem:[#allocation8 + $0x28] sm:$0xf]
    %v186 = vld [vmem:[#allocation8 + $0x2c] sm:$0xf]
    %v187 = vld [vmem:[#allocation8 + $0x30] sm:$0xf]
    %v188 = vld [vmem:[#allocation8 + $0x34] sm:$0xf]
    %v189 = vld [vmem:[#allocation8 + $0x38] sm:$0xf]
    %v190 = vld [vmem:[#allocation8 + $0x3c] sm:$0xf]
    %v191 = vld [vmem:[%s4] sm:$0x1]
    %v193 = vperm.slane %v191, 0
    %v211 = vunpack.c.l.b16 %v175
    %v212 = vunpack.c.l.b16 %v176
    %v213 = vunpack.c.l.b16 %v177
    %v214 = vunpack.c.l.b16 %v178
    %v215 = vunpack.c.l.b16 %v179
    %v216 = vunpack.c.l.b16 %v180
    %v217 = vunpack.c.l.b16 %v181
    %v218 = vunpack.c.l.b16 %v182
    %v219 = vunpack.c.l.b16 %v183
    %v220 = vunpack.c.l.b16 %v184
    %v221 = vunpack.c.l.b16 %v185
    %v222 = vunpack.c.l.b16 %v186
    %v223 = vunpack.c.l.b16 %v187
    %v224 = vunpack.c.l.b16 %v188
    %v225 = vunpack.c.l.b16 %v189
    %v226 = vunpack.c.l.b16 %v190
    %v227 = vpack.c.b16 %v212, %v211
    %v228 = vpack.c.b16 %v214, %v213
    %v229 = vpack.c.b16 %v216, %v215
    %v230 = vpack.c.b16 %v218, %v217
    %v231 = vpack.c.b16 %v220, %v219
    %v232 = vpack.c.b16 %v222, %v221
    %v233 = vpack.c.b16 %v224, %v223
    %v234 = vpack.c.b16 %v226, %v225
    %243 = vmatpush.bf16.msra.mxu0 %v234
    %244 = vmatpush.bf16.msra.mxu0 %v233
    %245 = vmatpush.bf16.msra.mxu0 %v232
    %246 = vmatpush.bf16.msra.mxu0 %v231
    %247 = vmatpush.bf16.msra.mxu0 %v230
    %248 = vmatpush.bf16.msra.mxu0 %v229
    %249 = vmatpush.bf16.msra.mxu0 %v228
    %250 = vmatpush.bf16.msra.mxu0 %v227
    %251 = vmatmul.bf16.gmra.mxu0 %v174
    %v252 = vpop.f32.mrf.mxu0
    %v253 = vadd.f32 %v193, %v252
    %v254 = vpop.f32.mrf.mxu0
    %v255 = vadd.f32 %v193, %v254
    %256 = vdwg.mxu0
    %257 = vmax.xlane.f32.xlu0 %v253
    %v258 = vpop.xlane.xlu0 %257
    %259 = vmax.xlane.f32.xlu0 %v255
    %v260 = vpop.xlane.xlu0 %259
    %v261 = vsub.f32 %v253, %v258
    %v262 = vsub.f32 %v255, %v260
    %v263 = vmul.f32 %v261, 1.442695
    %v264 = vpow.pop %v263
    %v265 = vmul.f32 %v262, 1.442695
    %v266 = vpow.pop %v265
    %267 = vadd.xlane.f32.xlu0 %v264
    %v268 = vpop.xlane.xlu0 %267
    %269 = vadd.xlane.f32.xlu0 %v266
    %v270 = vpop.xlane.xlu0 %269
    %v271 = vlog2.pop %v268
    %v272 = vmul.f32 %v271, 0.6931472
    %v273 = vlog2.pop %v270
    %v274 = vmul.f32 %v273, 0.6931472
    %v275 = vsub.f32 %v261, %v272
    %v276 = vsub.f32 %v262, %v274
    %277 = vst [vmem:[#allocation10] sm:$0xff] %v275
    %278 = vst [vmem:[#allocation10 + $0x8] sm:$0xff] %v276
    // Predicated region
    $region38: #{tpu_custom_call.1} parent=1 // pred_check
      _
    $region39: #{tpu_custom_call.1} parent=1 // pred_check_branch
      %280 = sbr.rel (0) target = $region41
    $region40: #{tpu_custom_call.1} parent=1 // pred_region
      %282 = vsyncadd [#allocation4], 0
      %s283 = sshll.u32 [#allocation10], 4
      %s284 = int_to_ptr.vmem [resolvable:$true] %s283
      %s285 = sshll.u32 %s5, 4
      %s286 = int_to_ptr.hbm [resolvable:$true] %s285
      %291 = dma.vmem_to_hbm [thread:$0]  %s284, 256, %s286, [#allocation4], 128, 128, 8
    $region41: #{tpu_custom_call.1} parent=1 // pred_fallthru
      _
    // Predicated region
    $region42: #{tpu_custom_call.1} parent=1 // pred_check
      _
    $region43: #{tpu_custom_call.1} parent=1 // pred_check_branch
      %293 = sbr.rel (0) target = $region45
    $region44: #{tpu_custom_call.1} parent=1 // pred_region
      %295 = dma.done [#allocation4], 256
    $region45: #{tpu_custom_call.1} parent=1 // pred_fallthru
      _
    %296 = vsyncpa [#allocation3], 1
    %297 = vsyncpa [#allocation6], 1
    %298 = vsyncpa [#allocation9], 1
    %299 = vsyncpa [#allocation4], 1

</llo_original>
